<compile_context>
chip_gen: v5e
topology: v5e:2x2
jax: 0.10.0
libtpu: 0.0.40
codegen_flags: <defaults>
</compile_context>

<pallas_src>
import jax
import jax.numpy as jnp
from jax.experimental import pallas as pl
from jax.experimental.pallas import tpu as pltpu


# ------------------------------ fused kernel ----------------------------------

def _make_fused_kernel(spatial_axis):
    """Kernel over one (Bt, C, HW) block (spatial_axis=2) or (Bt, HW, C) (spatial_axis=1)."""

    def kernel(x_ref, w1_ref, w2_ref, o_ref):
        # Global avg/max pooling.  Cast *inside* each reduction so Mosaic never
        # materializes a full f32 copy of the slab in VMEM.
        avg = jnp.mean(x_ref[...].astype(jnp.float32), axis=spatial_axis)      # (Bt, C)
        mx = jnp.max(x_ref[...], axis=spatial_axis).astype(jnp.float32)        # (Bt, C)

        w1 = w1_ref[...]                                                       # (Cr, C) f32
        w2 = w2_ref[...]                                                       # (C, Cr) f32

        # Shared MLP: relu(v @ w1.T) @ w2.T as broadcast-multiply + last-axis
        # reductions (VPU/XLU only; no MXU push/pop for these tiny matmuls).
        mid_a = jnp.maximum(jnp.sum(avg[:, None, :] * w1[None, :, :], axis=-1), 0.0)  # (Bt, Cr)
        mid_m = jnp.maximum(jnp.sum(mx[:, None, :] * w1[None, :, :], axis=-1), 0.0)
        out_a = jnp.sum(mid_a[:, None, :] * w2[None, :, :], axis=-1)                  # (Bt, C)
        out_m = jnp.sum(mid_m[:, None, :] * w2[None, :, :], axis=-1)
        gate = jax.nn.sigmoid(out_a + out_m)                                          # (Bt, C) f32

        cw = gate[:, :, None] if spatial_axis == 2 else gate[:, None, :]
        # Fused apply + single store.  f32 math (exact for f32; v5e has no bf16
        # VPU so bf16 would bounce through converts anyway), cast at the store.
        o_ref[...] = (x_ref[...].astype(jnp.float32) * cw).astype(o_ref.dtype)

    return kernel


# --------------------------- HW-tiled fallback kernels -------------------------

def _make_pool_kernel(hw_total, hw_tile):
    def kernel(x_ref, sum_ref, max_ref):
        j = pl.program_id(1)

        @pl.when(j == 0)
        def _():
            sum_ref[...] = jnp.zeros(sum_ref.shape, sum_ref.dtype)
            max_ref[...] = jnp.full(max_ref.shape, -jnp.inf, max_ref.dtype)

        xv = x_ref[0].astype(jnp.float32)                                      # (C, hw_tile)
        lane = jax.lax.broadcasted_iota(jnp.int32, xv.shape, 1)
        valid = (j * hw_tile + lane) < hw_total                                # mask padded tail
        sum_ref[0] += jnp.sum(jnp.where(valid, xv, 0.0), axis=1, keepdims=True)
        max_ref[0] = jnp.maximum(
            max_ref[0], jnp.max(jnp.where(valid, xv, -jnp.inf), axis=1, keepdims=True))

    return kernel


def _apply_kernel(x_ref, cw_ref, o_ref):
    o_ref[0] = (x_ref[0].astype(jnp.float32) * cw_ref[0]).astype(o_ref.dtype)


# --------------------------------- wrapper -------------------------------------

def _vmem_capacity_bytes():
    try:
        cap = getattr(pltpu.get_tpu_info(), "vmem_capacity_bytes", None)
        if cap:
            return int(cap)
    except Exception:
        pass
    return 64 * 1024 * 1024  # conservative (v7x per-TC figure)


def channel_attention_pallas(x, w1, w2, *, force_tiled=False):
    """x: (B, C, H, W) NCHW.  w1: (Cr, C).  w2: (C, Cr)  (1x1 conv weights, no bias)."""
    B, C, H, W = x.shape
    HW = H * W
    Cr = w1.shape[0]
    itemsize = jnp.dtype(x.dtype).itemsize

    w1f = jnp.asarray(w1, jnp.float32)
    w2f = jnp.asarray(w2, jnp.float32)
    weight_bytes = (w1f.size + w2f.size) * 4

    vmem_budget = int(_vmem_capacity_bytes() * 0.85)     # headroom for Mosaic internal scratch
    slab_bytes = C * HW * itemsize                       # one batch's activation slab

    cost = pl.CostEstimate(
        flops=int(2 * B * C * HW + 8 * B * C * Cr),
        transcendentals=int(2 * B * C),
        bytes_accessed=int(2 * B * C * HW * itemsize + weight_bytes),
    )

    # Fused path is viable iff a double-buffered single-batch in+out slab fits.
    fused_fits = 4 * slab_bytes + 2 * weight_bytes + (4 << 20) <= vmem_budget

    if fused_fits and not force_tiled:
        # ---------- batch-folded fully fused path: 1 HBM read + 1 HBM write ----------
        # Bt: blocks toward ~4 MiB when possible, keep >= min(B, 4) grid steps
        # (2 TCs on v7x + pipeline prefetch), and stay inside the VMEM budget.
        max_bt_vmem = max(1, (vmem_budget - 2 * weight_bytes - (4 << 20)) // (4 * slab_bytes))
        max_bt_steps = max(1, B // min(B, 4))
        Bt = int(max(1, min(B, max(1, (4 << 20) // slab_bytes), max_bt_steps, max_bt_vmem)))
        while B % Bt:                                     # keep batch blocks unpadded
            Bt -= 1

        needed = 4 * Bt * slab_bytes + 2 * weight_bytes + (4 << 20)
        vmem_limit = int(min(vmem_budget, max(32 << 20, needed)))

        # Lane-density heuristic: channels on lanes only when HW is lane-hostile
        # and C is a large multiple of 128 (e.g. C=512, H=W=7).
        channels_on_lanes = (HW % 128 != 0) and (C % 128 == 0) and (C >= 128)

        if channels_on_lanes:
            x2 = jnp.transpose(x, (0, 2, 3, 1)).reshape(B, HW, C)   # layout plumbing
            blk = (Bt, HW, C)
            spatial_axis = 1
        else:
            x2 = x.reshape(B, C, HW)                                # free (contiguous) view
            blk = (Bt, C, HW)
            spatial_axis = 2

        out2 = pl.pallas_call(
            _make_fused_kernel(spatial_axis),
            out_shape=jax.ShapeDtypeStruct(x2.shape, x.dtype),
            grid=(B // Bt,),
            in_specs=[
                pl.BlockSpec(blk, lambda i: (i, 0, 0)),
                pl.BlockSpec((Cr, C), lambda i: (0, 0)),
                pl.BlockSpec((C, Cr), lambda i: (0, 0)),
            ],
            out_specs=pl.BlockSpec(blk, lambda i: (i, 0, 0)),
            compiler_params=pltpu.CompilerParams(
                dimension_semantics=("parallel",),
                vmem_limit_bytes=vmem_limit,
            ),
            cost_estimate=cost,
        )(x2, w1f, w2f)

        if channels_on_lanes:
            return out2.reshape(B, H, W, C).transpose(0, 3, 1, 2)
        return out2.reshape(B, C, H, W)

    # -------- HW-tiled two-pass fallback (slab too big for VMEM; 1.5x HBM traffic) --------
    x2 = x.reshape(B, C, HW)
    if HW <= 128:
        hwt = HW
    else:
        target_lanes = max(128, (2 << 20) // max(1, C * itemsize))
        hwt = 128 * max(1, min(target_lanes // 128, HW // 128))
    n_t = pl.cdiv(HW, hwt)
    tile_bytes = C * hwt * itemsize
    vmem_limit = int(min(vmem_budget, max(32 << 20, 6 * tile_bytes + (4 << 20))))

    sums, maxs = pl.pallas_call(
        _make_pool_kernel(HW, hwt),
        out_shape=(jax.ShapeDtypeStruct((B, C, 1), jnp.float32),
                   jax.ShapeDtypeStruct((B, C, 1), jnp.float32)),
        grid=(B, n_t),
        in_specs=[pl.BlockSpec((1, C, hwt), lambda b, j: (b, 0, j))],
        out_specs=(pl.BlockSpec((1, C, 1), lambda b, j: (b, 0, 0)),
                   pl.BlockSpec((1, C, 1), lambda b, j: (b, 0, 0))),
        compiler_params=pltpu.CompilerParams(
            dimension_semantics=("parallel", "arbitrary"),
            vmem_limit_bytes=vmem_limit,
        ),
    )(x2)

    avg = sums[:, :, 0] / float(HW)                        # (B, C)
    mx = maxs[:, :, 0]

    def mlp(v):
        return jnp.maximum(v @ w1f.T, 0.0) @ w2f.T

    cw = jax.nn.sigmoid(mlp(avg) + mlp(mx))[:, :, None].astype(jnp.float32)   # (B, C, 1)

    out2 = pl.pallas_call(
        _apply_kernel,
        out_shape=jax.ShapeDtypeStruct((B, C, HW), x.dtype),
        grid=(B, n_t),
        in_specs=[pl.BlockSpec((1, C, hwt), lambda b, j: (b, 0, j)),
                  pl.BlockSpec((1, C, 1), lambda b, j: (b, 0, 0))],
        out_specs=pl.BlockSpec((1, C, hwt), lambda b, j: (b, 0, j)),
        compiler_params=pltpu.CompilerParams(
            dimension_semantics=("parallel", "parallel"),
            vmem_limit_bytes=vmem_limit,
        ),
        cost_estimate=cost,
    )(x2, cw)
    return out2.reshape(B, C, H, W)


# ----------------------------- pure-JAX reference -------------------------------

def channel_attention_ref(x, w1, w2):
    avg = jnp.mean(x, axis=(2, 3))                          # (B, C)
    mx = jnp.max(x, axis=(2, 3))                            # (B, C)

    def mlp(v):
        return jnp.maximum(v @ w1.T, 0.0) @ w2.T

    cw = jax.nn.sigmoid(mlp(avg) + mlp(mx))[:, :, None, None]
    return x * cw


# ------------------------------------- main -------------------------------------

if __name__ == "__main__":
    B, C, H, W = 2, 32, 16, 16                              # reduction_ratio=16 -> Cr = 2
    Cr = C // 16

    key = jax.random.PRNGKey(0)
    k1, k2, kx = jax.random.split(key, 3)
    w1 = jax.random.normal(k1, (Cr, C), jnp.float32) * 0.2  # Conv2d(C, Cr, 1, bias=False)
    w2 = jax.random.normal(k2, (C, Cr), jnp.float32) * 0.2  # Conv2d(Cr, C, 1, bias=False)
    x = jax.random.normal(kx, (B, C, H, W), jnp.float32)

    # Fused batch-folded path.
    out = jax.block_until_ready(jax.jit(channel_attention_pallas)(x, w1, w2))
    ref = channel_attention_ref(x, w1, w2)
    assert out.shape == ref.shape == (B, C, H, W)
    err = float(jnp.max(jnp.abs(out - ref)))
    assert err < 1e-4, f"fused path mismatch vs reference: {err}"

    # Also exercise the HW-tiled fallback (with a masked partial last tile).
    H2 = W2 = 12                                            # HW = 144 -> tiles 128 + 16 (masked)
    x_big = jax.random.normal(kx, (B, C, H2, W2), jnp.float32)
    tiled_fn = jax.jit(lambda a, b, c: channel_attention_pallas(a, b, c, force_tiled=True))
    out2 = jax.block_until_ready(tiled_fn(x_big, w1, w2))
    ref2 = channel_attention_ref(x_big, w1, w2)
    err2 = float(jnp.max(jnp.abs(out2 - ref2)))
    assert out2.shape == ref2.shape and err2 < 1e-4, f"tiled path mismatch vs reference: {err2}"

    print("KERNEL_OK")
</pallas_src>

<mosaic_0001>
module attributes {stable_mosaic.version = 11 : i64} {
  func.func @kernel(%arg0: i32, %arg1: memref<1x32x256xf32, #tpu.memory_space<vmem>>, %arg2: memref<2x32xf32, #tpu.memory_space<vmem>>, %arg3: memref<32x2xf32, #tpu.memory_space<vmem>>, %arg4: memref<1x32x256xf32, #tpu.memory_space<vmem>>) attributes {dimension_semantics = [#tpu.dimension_semantics<parallel>], iteration_bounds = array<i64: 2>, scalar_prefetch = 0 : i64, scratch_operands = 0 : i64, tpu.core_type = #tpu.core_type<tc>, window_params = [{transform_indices = @transform_0, window_bounds = array<i64: 1, 32, 256>}, {pipeline_mode = #tpu.pipeline_mode<synchronous>, transform_indices = @transform_1, window_bounds = array<i64: 2, 32>}, {pipeline_mode = #tpu.pipeline_mode<synchronous>, transform_indices = @transform_2, window_bounds = array<i64: 32, 2>}, {transform_indices = @transform_3, window_bounds = array<i64: 1, 32, 256>}]} {
    %c0 = arith.constant 0 : index
    %c0_0 = arith.constant 0 : index
    %c0_1 = arith.constant 0 : index
    %0 = vector.load %arg1[%c0, %c0_0, %c0_1] : memref<1x32x256xf32, #tpu.memory_space<vmem>>, vector<1x32x256xf32>
    %cst = arith.constant dense<0.000000e+00> : vector<1x32xf32>
    %1 = vector.multi_reduction <add>, %0, %cst [2] : vector<1x32x256xf32> to vector<1x32xf32>
    %cst_2 = arith.constant 2.560000e+02 : f32
    %2 = vector.broadcast %cst_2 : f32 to vector<1x32xf32>
    %3 = arith.divf %1, %2 : vector<1x32xf32>
    %c0_3 = arith.constant 0 : index
    %c0_4 = arith.constant 0 : index
    %c0_5 = arith.constant 0 : index
    %4 = vector.load %arg1[%c0_3, %c0_4, %c0_5] : memref<1x32x256xf32, #tpu.memory_space<vmem>>, vector<1x32x256xf32>
    %cst_6 = arith.constant dense<0xFF800000> : vector<1x32xf32>
    %5 = vector.multi_reduction <maximumf>, %4, %cst_6 [2] : vector<1x32x256xf32> to vector<1x32xf32>
    %c0_7 = arith.constant 0 : index
    %c0_8 = arith.constant 0 : index
    %6 = vector.load %arg2[%c0_7, %c0_8] : memref<2x32xf32, #tpu.memory_space<vmem>>, vector<2x32xf32>
    %c0_9 = arith.constant 0 : index
    %c0_10 = arith.constant 0 : index
    %7 = vector.load %arg3[%c0_9, %c0_10] : memref<32x2xf32, #tpu.memory_space<vmem>>, vector<32x2xf32>
    %8 = vector.shape_cast %3 : vector<1x32xf32> to vector<1x1x32xf32>
    %9 = vector.shape_cast %6 : vector<2x32xf32> to vector<1x2x32xf32>
    %10 = vector.broadcast %8 : vector<1x1x32xf32> to vector<1x2x32xf32>
    %11 = arith.mulf %10, %9 : vector<1x2x32xf32>
    %cst_11 = arith.constant dense<0.000000e+00> : vector<1x2xf32>
    %12 = vector.multi_reduction <add>, %11, %cst_11 [2] : vector<1x2x32xf32> to vector<1x2xf32>
    %cst_12 = arith.constant 0.000000e+00 : f32
    %13 = vector.broadcast %cst_12 : f32 to vector<1x2xf32>
    %14 = arith.maximumf %12, %13 : vector<1x2xf32>
    %15 = vector.shape_cast %5 : vector<1x32xf32> to vector<1x1x32xf32>
    %16 = vector.shape_cast %6 : vector<2x32xf32> to vector<1x2x32xf32>
    %17 = vector.broadcast %15 : vector<1x1x32xf32> to vector<1x2x32xf32>
    %18 = arith.mulf %17, %16 : vector<1x2x32xf32>
    %cst_13 = arith.constant dense<0.000000e+00> : vector<1x2xf32>
    %19 = vector.multi_reduction <add>, %18, %cst_13 [2] : vector<1x2x32xf32> to vector<1x2xf32>
    %cst_14 = arith.constant 0.000000e+00 : f32
    %20 = vector.broadcast %cst_14 : f32 to vector<1x2xf32>
    %21 = arith.maximumf %19, %20 : vector<1x2xf32>
    %22 = vector.shape_cast %14 : vector<1x2xf32> to vector<1x1x2xf32>
    %23 = vector.shape_cast %7 : vector<32x2xf32> to vector<1x32x2xf32>
    %24 = vector.broadcast %22 : vector<1x1x2xf32> to vector<1x32x2xf32>
    %25 = arith.mulf %24, %23 : vector<1x32x2xf32>
    %cst_15 = arith.constant dense<0.000000e+00> : vector<1x32xf32>
    %26 = vector.multi_reduction <add>, %25, %cst_15 [2] : vector<1x32x2xf32> to vector<1x32xf32>
    %27 = vector.shape_cast %21 : vector<1x2xf32> to vector<1x1x2xf32>
    %28 = vector.shape_cast %7 : vector<32x2xf32> to vector<1x32x2xf32>
    %29 = vector.broadcast %27 : vector<1x1x2xf32> to vector<1x32x2xf32>
    %30 = arith.mulf %29, %28 : vector<1x32x2xf32>
    %cst_16 = arith.constant dense<0.000000e+00> : vector<1x32xf32>
    %31 = vector.multi_reduction <add>, %30, %cst_16 [2] : vector<1x32x2xf32> to vector<1x32xf32>
    %32 = arith.addf %26, %31 : vector<1x32xf32>
    %33 = arith.negf %32 : vector<1x32xf32>
    %34 = math.exp %33 : vector<1x32xf32>
    %cst_17 = arith.constant 1.000000e+00 : f32
    %35 = vector.broadcast %cst_17 : f32 to vector<1x32xf32>
    %36 = arith.addf %35, %34 : vector<1x32xf32>
    %37 = arith.divf %35, %36 : vector<1x32xf32>
    %38 = vector.shape_cast %37 : vector<1x32xf32> to vector<1x32x1xf32>
    %c0_18 = arith.constant 0 : index
    %c0_19 = arith.constant 0 : index
    %c0_20 = arith.constant 0 : index
    %39 = vector.load %arg1[%c0_18, %c0_19, %c0_20] : memref<1x32x256xf32, #tpu.memory_space<vmem>>, vector<1x32x256xf32>
    %40 = vector.broadcast %38 : vector<1x32x1xf32> to vector<1x32x256xf32>
    %41 = arith.mulf %39, %40 : vector<1x32x256xf32>
    %c0_21 = arith.constant 0 : index
    %c0_22 = arith.constant 0 : index
    %c0_23 = arith.constant 0 : index
    %42 = vector.load %arg4[%c0_21, %c0_22, %c0_23] : memref<1x32x256xf32, #tpu.memory_space<vmem>>, vector<1x32x256xf32>
    tpu.vector_store %arg4[%c0_21, %c0_22, %c0_23], %41 {strides = array<i32>} : memref<1x32x256xf32, #tpu.memory_space<vmem>>, vector<1x32x256xf32>,
    return
  }
  func.func @transform_0(%arg0: i32) -> (i32, i32, i32) {
    %c0_i32 = arith.constant 0 : i32
    %c0_i32_0 = arith.constant 0 : i32
    %c0_i32_1 = arith.constant 0 : i32
    return %arg0, %c0_i32, %c0_i32_0 : i32, i32, i32
  }
  func.func @transform_1(%arg0: i32) -> (i32, i32) {
    %c0_i32 = arith.constant 0 : i32
    %c0_i32_0 = arith.constant 0 : i32
    %c0_i32_1 = arith.constant 0 : i32
    return %c0_i32, %c0_i32_0 : i32, i32
  }
  func.func @transform_2(%arg0: i32) -> (i32, i32) {
    %c0_i32 = arith.constant 0 : i32
    %c0_i32_0 = arith.constant 0 : i32
    %c0_i32_1 = arith.constant 0 : i32
    return %c0_i32, %c0_i32_0 : i32, i32
  }
  func.func @transform_3(%arg0: i32) -> (i32, i32, i32) {
    %c0_i32 = arith.constant 0 : i32
    %c0_i32_0 = arith.constant 0 : i32
    %c0_i32_1 = arith.constant 0 : i32
    return %arg0, %c0_i32, %c0_i32_0 : i32, i32, i32
  }
}

</mosaic_0001>

<llo_original>
// kernel: channel_attention_pallas.1
$region0: #{channel_attention_pallas.1}
  #allocation0 [shape = 'u32[]', space=smem, size = 0x4, offset = 0x4, fixed_abs, tag = 'smem constant byte address 0x4 - core index']
  #allocation1 [shape = 'u32[72,128]{1,0:T(1,128)}', space=vmem, size = 0x9000, scoped, tag = 'internal scratch']
  %s0 = inlined_call_operand.vmem [shape: f32[2,32,256], index: 0, kind: input, shape index: {}]
  %s1 = inlined_call_operand.vmem [shape: f32[2,32], index: 1, kind: input, shape index: {}]
  %s2 = inlined_call_operand.vmem [shape: f32[32,2], index: 2, kind: input, shape index: {}]
  %s3 = inlined_call_operand.vmem [shape: f32[2,32,256], index: 3, kind: output, shape index: {}]
  %s4 = sld [smem:[#allocation0]]
  $region45: #{channel_attention_pallas.1} parent=0
    _
  %s6 = ssub.s32 1, %s4
  %s7 = scalar_select 0, %s6, %s4
  loop: start=0, step=1, limit=4
  $region2: #{channel_attention_pallas.1} parent=0 // loop_pre_header
    _
  $region3: #{channel_attention_pallas.1} parent=0 // loop_header
    %s9 = sphi 0, %s13
    %p10 = scmp.ge.s32.totalorder %s9, 4
    %s19 = sphi 0, %s21
    %s22 = sphi 0, %s19
    %s23 = sphi 0, %s22
    %s39 = sphi 0, %s23
    %s43 = sphi 0, %s43
    %s45 = sphi 0, %s43
    %s46 = sphi 0, %s45
    %s60 = sphi 0, %s46
    %s64 = sphi 0, %s64
    %s66 = sphi 0, %s64
    %s67 = sphi 0, %s66
    %s81 = sphi 0, %s67
    %s87 = sphi 0, %s89
    %s90 = sphi 0, %s87
    %s91 = sphi 0, %s90
    %s107 = sphi 0, %s91
  $region4: #{channel_attention_pallas.1} parent=0 // loop_header_branch
    %12 = sbr.rel (%p10) target = $region8
  $region5: #{channel_attention_pallas.1} parent=0 // loop_body
    %s14 = ssub.s32 %s9, 1
    %s15 = ssub.s32 %s9, 2
    %s16 = sadd.s32 %s9, 1
    %s17 = ssub.s32 %s9, %s16
    %p18 = scmp.eq.s32.totalorder %s17, 0
    %s20 = sadd.s32 %s19, 1
    %s21 = scalar_select %p18, %s19, %s20
    %p24 = pneg %p18
    %p25 = scmp.eq.s32.totalorder %s9, 1
    %p26 = por %p24, %p25
    %p27 = scmp.ne.s32.totalorder %s19, %s22
    %p28 = scmp.eq.s32.totalorder %s9, 0
    %p29 = por %p27, %p28
    %p30 = scmp.ne.s32.totalorder %s19, %s22
    %p31 = scmp.eq.s32.totalorder %s14, 1
    %p32 = por %p30, %p31
    %p33 = scmp.ne.s32.totalorder %s22, %s23
    %p34 = scmp.eq.s32.totalorder %s14, 0
    %p35 = por %p33, %p34
    %p36 = scmp.ne.s32.totalorder %s22, %s23
    %p37 = scmp.eq.s32.totalorder %s15, 1
    %p38 = por %p36, %p37
    %p40 = scmp.ne.s32.totalorder %s23, %s39
    %p41 = scmp.eq.s32.totalorder %s15, 0
    %p42 = por %p40, %p41
    %s44 = sadd.s32 %s43, 1
    %p47 = scmp.eq.s32.totalorder %s9, 1
    %p48 = scmp.ne.s32.totalorder %s43, %s45
    %p49 = scmp.eq.s32.totalorder %s9, 0
    %p50 = por %p48, %p49
    %p51 = scmp.ne.s32.totalorder %s43, %s45
    %p52 = scmp.eq.s32.totalorder %s14, 1
    %p53 = por %p51, %p52
    %p54 = scmp.ne.s32.totalorder %s45, %s46
    %p55 = scmp.eq.s32.totalorder %s14, 0
    %p56 = por %p54, %p55
    %p57 = scmp.ne.s32.totalorder %s45, %s46
    %p58 = scmp.eq.s32.totalorder %s15, 1
    %p59 = por %p57, %p58
    %p61 = scmp.ne.s32.totalorder %s46, %s60
    %p62 = scmp.eq.s32.totalorder %s15, 0
    %p63 = por %p61, %p62
    %s65 = sadd.s32 %s64, 1
    %p68 = scmp.eq.s32.totalorder %s9, 1
    %p69 = scmp.ne.s32.totalorder %s64, %s66
    %p70 = scmp.eq.s32.totalorder %s9, 0
    %p71 = por %p69, %p70
    %p72 = scmp.ne.s32.totalorder %s64, %s66
    %p73 = scmp.eq.s32.totalorder %s14, 1
    %p74 = por %p72, %p73
    %p75 = scmp.ne.s32.totalorder %s66, %s67
    %p76 = scmp.eq.s32.totalorder %s14, 0
    %p77 = por %p75, %p76
    %p78 = scmp.ne.s32.totalorder %s66, %s67
    %p79 = scmp.eq.s32.totalorder %s15, 1
    %p80 = por %p78, %p79
    %p82 = scmp.ne.s32.totalorder %s67, %s81
    %p83 = scmp.eq.s32.totalorder %s15, 0
    %p84 = por %p82, %p83
    %s85 = ssub.s32 %s9, %s16
    %p86 = scmp.eq.s32.totalorder %s85, 0
    %s88 = sadd.s32 %s87, 1
    %s89 = scalar_select %p86, %s87, %s88
    %p92 = pneg %p86
    %p93 = scmp.eq.s32.totalorder %s9, 1
    %p94 = por %p92, %p93
    %p95 = scmp.ne.s32.totalorder %s87, %s90
    %p96 = scmp.eq.s32.totalorder %s9, 0
    %p97 = por %p95, %p96
    %p98 = scmp.ne.s32.totalorder %s87, %s90
    %p99 = scmp.eq.s32.totalorder %s14, 1
    %p100 = por %p98, %p99
    %p101 = scmp.ne.s32.totalorder %s90, %s91
    %p102 = scmp.eq.s32.totalorder %s14, 0
    %p103 = por %p101, %p102
    %p104 = scmp.ne.s32.totalorder %s90, %s91
    %p105 = scmp.eq.s32.totalorder %s15, 1
    %p106 = por %p104, %p105
    %p108 = scmp.ne.s32.totalorder %s91, %s107
    %p109 = scmp.eq.s32.totalorder %s15, 0
    %p110 = por %p108, %p109
    %p111 = scmp.le.s32.totalorder 1, %s9
    %p112 = scmp.lt.s32.totalorder %s9, 3
    %p113 = pnand %p111, %p112
    %p114 = pneg %p113
    // Predicated region
    $region9: #{channel_attention_pallas.1} parent=5 // pred_check
      _
    $region10: #{channel_attention_pallas.1} parent=5 // pred_check_branch
      %116 = sbr.rel (%p113) target = $region12
    $region11: #{channel_attention_pallas.1} parent=5 // pred_region
      %s117 = ssub.s32 %s9, 1
      // Predicated region
      $region13: #{channel_attention_pallas.1} parent=11 // pred_check
        %p118 = pneg %p56
      $region14: #{channel_attention_pallas.1} parent=11 // pred_check_branch
        %120 = sbr.rel (%p118) target = $region16
      $region15: #{channel_attention_pallas.1} parent=11 // pred_region
        _
      $region16: #{channel_attention_pallas.1} parent=11 // pred_fallthru
        _
      // Predicated region
      $region17: #{channel_attention_pallas.1} parent=11 // pred_check
        %p121 = pneg %p77
      $region18: #{channel_attention_pallas.1} parent=11 // pred_check_branch
        %123 = sbr.rel (%p121) target = $region20
      $region19: #{channel_attention_pallas.1} parent=11 // pred_region
        _
      $region20: #{channel_attention_pallas.1} parent=11 // pred_fallthru
        _
    $region12: #{channel_attention_pallas.1} parent=5 // pred_fallthru
      _
    %p124 = scmp.lt.s32.totalorder %s9, 2
    // Predicated region
    $region21: #{channel_attention_pallas.1} parent=5 // pred_check
      %p125 = pneg %p124
    $region22: #{channel_attention_pallas.1} parent=5 // pred_check_branch
      %127 = sbr.rel (%p125) target = $region24
    $region23: #{channel_attention_pallas.1} parent=5 // pred_region
      // Predicated region
      $region25: #{channel_attention_pallas.1} parent=23 // pred_check
        %p128 = pneg %p29
      $region26: #{channel_attention_pallas.1} parent=23 // pred_check_branch
        %130 = sbr.rel (%p128) target = $region28
      $region27: #{channel_attention_pallas.1} parent=23 // pred_region
        %p131 = scmp.lt.s32.totalorder %s9, 1
        %s132 = scalar_select %p131, %s9, 1
        %s133 = smul.addr %s132, 8
        %s134 = smul.addr %s133, 8
        %s135 = scalar_lea.vmem %s0, %s134
      $region28: #{channel_attention_pallas.1} parent=23 // pred_fallthru
        _
    $region24: #{channel_attention_pallas.1} parent=5 // pred_fallthru
      _
    %p136 = scmp.le.s32.totalorder 1, %s9
    %p137 = scmp.lt.s32.totalorder %s9, 3
    %p138 = pnand %p136, %p137
    %p139 = pneg %p138
    // Predicated region
    $region29: #{channel_attention_pallas.1} parent=5 // pred_check
      _
    $region30: #{channel_attention_pallas.1} parent=5 // pred_check_branch
      %141 = sbr.rel (%p138) target = $region32
    $region31: #{channel_attention_pallas.1} parent=5 // pred_region
      %s142 = ssub.s32 %s9, 1
      %p143 = scmp.lt.s32.totalorder %s14, 1
      %s144 = scalar_select %p143, %s14, 1
      %s145 = smul.addr %s144, 8
      %s146 = smul.addr %s145, 8
      %s147 = scalar_lea.vmem %s0, %s146
      %p148 = pneg %p35
      %p149 = pneg %p32
      %p150 = pneg %p56
      %p151 = pneg %p53
      %p152 = pneg %p77
      %p153 = pneg %p74
      %p154 = pneg %p103
      %p155 = pneg %p100
      %p156 = scmp.lt.s32.totalorder %s14, 1
      %s157 = scalar_select %p156, %s14, 1
      %s158 = smul.addr %s157, 8
      %s159 = smul.addr %s158, 8
      %s160 = scalar_lea.vmem %s3, %s159
      %p161 = scmp.lt.s32.totalorder %s14, 1
      %s162 = scalar_select %p161, %s14, 1
      %s163 = smul.addr %s162, 8
      %s164 = smul.addr %s163, 8
      %s165 = scalar_lea.vmem %s0, %s164
      %p166 = scmp.lt.s32.totalorder %s14, 1
      %s167 = scalar_select %p166, %s14, 1
      %s168 = smul.addr %s167, 8
      %s169 = smul.addr %s168, 8
      %s170 = scalar_lea.vmem %s3, %s169
      %v171 = vld [vmem:[%s165] sm:$0xff]
      %v172 = vld [vmem:[%s165 + $0x8] sm:$0xff]
      %v173 = vld [vmem:[%s165 + $0x10] sm:$0xff]
      %v174 = vld [vmem:[%s165 + $0x18] sm:$0xff]
      %v175 = vld [vmem:[%s165 + $0x20] sm:$0xff]
      %v176 = vld [vmem:[%s165 + $0x28] sm:$0xff]
      %v177 = vld [vmem:[%s165 + $0x30] sm:$0xff]
      %v178 = vld [vmem:[%s165 + $0x38] sm:$0xff]
      %v179 = vadd.f32 %v171, %v172
      %180 = vadd.xlane.f32.xlu0 %v179
      %v181 = vpop.xlane.xlu0 %180
      %v182 = vadd.f32 %v173, %v174
      %183 = vadd.xlane.f32.xlu0 %v182
      %v184 = vpop.xlane.xlu0 %183
      %v185 = vadd.f32 %v175, %v176
      %186 = vadd.xlane.f32.xlu0 %v185
      %v187 = vpop.xlane.xlu0 %186
      %v188 = vadd.f32 %v177, %v178
      %189 = vadd.xlane.f32.xlu0 %v188
      %v190 = vpop.xlane.xlu0 %189
      %v191 = vrcp.pop 256.0
      %v192 = vmul.f32 256.0, %v191
      %v193 = vsub.f32 1.0, %v192
      %v194 = vmul.f32 %v191, %v193
      %v195 = vadd.f32 %v191, %v194
      %vm196 = vweird.f32 %v191
      %v197 = vsel %vm196, %v191, %v195
      %v198 = vmul.f32 %v181, %v197
      %v199 = vmul.f32 %v184, %v197
      %v200 = vmul.f32 %v187, %v197
      %v201 = vmul.f32 %v190, %v197
      %v202 = vmax.f32 %v171, %v172
      %203 = vmax.xlane.f32.xlu0 %v202
      %v204 = vpop.xlane.xlu0 %203
      %v205 = vmax.f32 %v173, %v174
      %206 = vmax.xlane.f32.xlu0 %v205
      %v207 = vpop.xlane.xlu0 %206
      %v208 = vmax.f32 %v175, %v176
      %209 = vmax.xlane.f32.xlu0 %v208
      %v210 = vpop.xlane.xlu0 %209
      %v211 = vmax.f32 %v177, %v178
      %212 = vmax.xlane.f32.xlu0 %v211
      %v213 = vpop.xlane.xlu0 %212
      %v214 = vld [vmem:[%s1] sm:$0x3]
      %v215 = vld [vmem:[%s2] sm:$0xff]
      %v216 = vld [vmem:[%s2 + $0x8] sm:$0xff]
      %v217 = vld [vmem:[%s2 + $0x10] sm:$0xff]
      %v218 = vld [vmem:[%s2 + $0x18] sm:$0xff]
      %v220 = vperm.slane %v214, 0
      %v221 = vlaneseq
      %v222 = vshrl.u32 %v221, 7
      %224 = vset.pattern.permute.xlu0 %v222
      %225 = vperm.xlu0 %224, %v220
      %v226 = vpop.permute.xlu0 %225
      %v227 = vlaneseq
      %v228 = vshrl.u32 %v227, 7
      %v229 = vadd.s32 %v228, 8
      %230 = vset.pattern.permute.xlu0 %v229
      %231 = vperm.xlu0 %230, %v220
      %v232 = vpop.permute.xlu0 %231
      %v233 = vlaneseq
      %v234 = vshrl.u32 %v233, 7
      %v235 = vadd.s32 %v234, 16
      %236 = vset.pattern.permute.xlu0 %v235
      %237 = vperm.xlu0 %236, %v220
      %v238 = vpop.permute.xlu0 %237
      %v239 = vlaneseq
      %v240 = vshrl.u32 %v239, 7
      %v241 = vadd.s32 %v240, 24
      %242 = vset.pattern.permute.xlu0 %v241
      %243 = vperm.xlu0 %242, %v220
      %v244 = vpop.permute.xlu0 %243
      %v245 = vperm.slane %v214, 1
      %v246 = vlaneseq
      %v247 = vshrl.u32 %v246, 7
      %249 = vset.pattern.permute.xlu0 %v247
      %250 = vperm.xlu0 %249, %v245
      %v251 = vpop.permute.xlu0 %250
      %v252 = vlaneseq
      %v253 = vshrl.u32 %v252, 7
      %v254 = vadd.s32 %v253, 8
      %255 = vset.pattern.permute.xlu0 %v254
      %256 = vperm.xlu0 %255, %v245
      %v257 = vpop.permute.xlu0 %256
      %v258 = vlaneseq
      %v259 = vshrl.u32 %v258, 7
      %v260 = vadd.s32 %v259, 16
      %261 = vset.pattern.permute.xlu0 %v260
      %262 = vperm.xlu0 %261, %v245
      %v263 = vpop.permute.xlu0 %262
      %v264 = vlaneseq
      %v265 = vshrl.u32 %v264, 7
      %v266 = vadd.s32 %v265, 24
      %267 = vset.pattern.permute.xlu0 %v266
      %268 = vperm.xlu0 %267, %v245
      %v269 = vpop.permute.xlu0 %268
      %v278 = vmul.f32 %v198, %v226
      %v279 = vmul.f32 %v199, %v232
      %v280 = vmul.f32 %v200, %v238
      %v281 = vmul.f32 %v201, %v244
      %v282 = vmul.f32 %v198, %v251
      %v283 = vmul.f32 %v199, %v257
      %v284 = vmul.f32 %v200, %v263
      %v285 = vmul.f32 %v201, %v269
      %294 = vset.pattern.permute.xlu0 0
      %295 = vperm.xlu0 %294, %v278
      %v296 = vpop.permute.xlu0 %295
      %297 = vset.pattern.permute.xlu0 0
      %298 = vperm.xlu0 %297, %v279
      %v299 = vpop.permute.xlu0 %298
      %300 = vset.pattern.permute.xlu0 0
      %301 = vperm.xlu0 %300, %v280
      %v302 = vpop.permute.xlu0 %301
      %303 = vset.pattern.permute.xlu0 0
      %304 = vperm.xlu0 %303, %v281
      %v305 = vpop.permute.xlu0 %304
      %306 = vset.pattern.permute.xlu0 0
      %307 = vperm.xlu0 %306, %v282
      %v308 = vpop.permute.xlu0 %307
      %309 = vset.pattern.permute.xlu0 0
      %310 = vperm.xlu0 %309, %v283
      %v311 = vpop.permute.xlu0 %310
      %312 = vset.pattern.permute.xlu0 0
      %313 = vperm.xlu0 %312, %v284
      %v314 = vpop.permute.xlu0 %313
      %315 = vset.pattern.permute.xlu0 0
      %316 = vperm.xlu0 %315, %v285
      %v317 = vpop.permute.xlu0 %316
      %v318 = vlaneseq
      %v319 = vand.u32 %v318, 127
      %v320 = vperm.slane %v296, %v319
      %v321 = vadd.s32 %v319, 4294967288
      %v322 = vperm.slane %v299, %v321
      %vm323 = vcmask 130112
      %v324 = vsel %vm323, %v322, %v320
      %v325 = vadd.s32 %v319, 4294967280
      %v326 = vperm.slane %v302, %v325
      %vm327 = vcmask 195712
      %v328 = vsel %vm327, %v326, %v324
      %v329 = vadd.s32 %v319, 4294967272
      %v330 = vperm.slane %v305, %v329
      %vm331 = vcmask 261312
      %v332 = vsel %vm331, %v330, %v328
      %v333 = vperm.slane %v308, %v319
      %v334 = vperm.slane %v311, %v321
      %v335 = vsel %vm323, %v334, %v333
      %v336 = vperm.slane %v314, %v325
      %v337 = vsel %vm327, %v336, %v335
      %v338 = vperm.slane %v317, %v329
      %v339 = vsel %vm331, %v338, %v337
      %vm340 = vcmask 1041409
      %v341 = vsel %vm340, %v339, %v332
      %vm343 = vcmask 254976
      %v344 = vsel %vm343, %v341, 0.0
      %345 = vadd.xlane.f32.xlu0 %v344
      %v346 = vpop.xlane.xlu0 %345
      %v347 = vmax.f32 %v346, 0.0
      %v348 = vmul.f32 %v204, %v226
      %v349 = vmul.f32 %v207, %v232
      %v350 = vmul.f32 %v210, %v238
      %v351 = vmul.f32 %v213, %v244
      %v352 = vmul.f32 %v204, %v251
      %v353 = vmul.f32 %v207, %v257
      %v354 = vmul.f32 %v210, %v263
      %v355 = vmul.f32 %v213, %v269
      %364 = vset.pattern.permute.xlu0 0
      %365 = vperm.xlu0 %364, %v348
      %v366 = vpop.permute.xlu0 %365
      %367 = vset.pattern.permute.xlu0 0
      %368 = vperm.xlu0 %367, %v349
      %v369 = vpop.permute.xlu0 %368
      %370 = vset.pattern.permute.xlu0 0
      %371 = vperm.xlu0 %370, %v350
      %v372 = vpop.permute.xlu0 %371
      %373 = vset.pattern.permute.xlu0 0
      %374 = vperm.xlu0 %373, %v351
      %v375 = vpop.permute.xlu0 %374
      %376 = vset.pattern.permute.xlu0 0
      %377 = vperm.xlu0 %376, %v352
      %v378 = vpop.permute.xlu0 %377
      %379 = vset.pattern.permute.xlu0 0
      %380 = vperm.xlu0 %379, %v353
      %v381 = vpop.permute.xlu0 %380
      %382 = vset.pattern.permute.xlu0 0
      %383 = vperm.xlu0 %382, %v354
      %v384 = vpop.permute.xlu0 %383
      %385 = vset.pattern.permute.xlu0 0
      %386 = vperm.xlu0 %385, %v355
      %v387 = vpop.permute.xlu0 %386
      %v388 = vperm.slane %v366, %v319
      %v389 = vperm.slane %v369, %v321
      %v390 = vsel %vm323, %v389, %v388
      %v391 = vperm.slane %v372, %v325
      %v392 = vsel %vm327, %v391, %v390
      %v393 = vperm.slane %v375, %v329
      %v394 = vsel %vm331, %v393, %v392
      %v395 = vperm.slane %v378, %v319
      %v396 = vperm.slane %v381, %v321
      %v397 = vsel %vm323, %v396, %v395
      %v398 = vperm.slane %v384, %v325
      %v399 = vsel %vm327, %v398, %v397
      %v400 = vperm.slane %v387, %v329
      %v401 = vsel %vm331, %v400, %v399
      %v402 = vsel %vm340, %v401, %v394
      %v404 = vsel %vm343, %v402, 0.0
      %405 = vadd.xlane.f32.xlu0 %v404
      %v406 = vpop.xlane.xlu0 %405
      %v407 = vmax.f32 %v406, 0.0
      %v412 = vperm.slane %v215, 0
      %v413 = vlaneseq
      %v414 = vshrl.u32 %v413, 7
      %416 = vset.pattern.permute.xlu0 %v414
      %417 = vperm.xlu0 %416, %v412
      %v418 = vpop.permute.xlu0 %417
      %v419 = vperm.slane %v215, 1
      %v420 = vlaneseq
      %v421 = vshrl.u32 %v420, 7
      %423 = vset.pattern.permute.xlu0 %v421
      %424 = vperm.xlu0 %423, %v419
      %v425 = vpop.permute.xlu0 %424
      %v426 = vperm.slane %v215, 2
      %v427 = vlaneseq
      %v428 = vshrl.u32 %v427, 7
      %430 = vset.pattern.permute.xlu0 %v428
      %431 = vperm.xlu0 %430, %v426
      %v432 = vpop.permute.xlu0 %431
      %v433 = vperm.slane %v215, 3
      %v434 = vlaneseq
      %v435 = vshrl.u32 %v434, 7
      %437 = vset.pattern.permute.xlu0 %v435
      %438 = vperm.xlu0 %437, %v433
      %v439 = vpop.permute.xlu0 %438
      %v440 = vperm.slane %v215, 4
      %v441 = vlaneseq
      %v442 = vshrl.u32 %v441, 7
      %444 = vset.pattern.permute.xlu0 %v442
      %445 = vperm.xlu0 %444, %v440
      %v446 = vpop.permute.xlu0 %445
      %v447 = vperm.slane %v215, 5
      %v448 = vlaneseq
      %v449 = vshrl.u32 %v448, 7
      %451 = vset.pattern.permute.xlu0 %v449
      %452 = vperm.xlu0 %451, %v447
      %v453 = vpop.permute.xlu0 %452
      %v454 = vperm.slane %v215, 6
      %v455 = vlaneseq
      %v456 = vshrl.u32 %v455, 7
      %458 = vset.pattern.permute.xlu0 %v456
      %459 = vperm.xlu0 %458, %v454
      %v460 = vpop.permute.xlu0 %459
      %v461 = vperm.slane %v215, 7
      %v462 = vlaneseq
      %v463 = vshrl.u32 %v462, 7
      %465 = vset.pattern.permute.xlu0 %v463
      %466 = vperm.xlu0 %465, %v461
      %v467 = vpop.permute.xlu0 %466
      %v468 = vperm.slane %v216, 0
      %v469 = vlaneseq
      %v470 = vshrl.u32 %v469, 7
      %472 = vset.pattern.permute.xlu0 %v470
      %473 = vperm.xlu0 %472, %v468
      %v474 = vpop.permute.xlu0 %473
      %v475 = vperm.slane %v216, 1
      %v476 = vlaneseq
      %v477 = vshrl.u32 %v476, 7
      %479 = vset.pattern.permute.xlu0 %v477
      %480 = vperm.xlu0 %479, %v475
      %v481 = vpop.permute.xlu0 %480
      %v482 = vperm.slane %v216, 2
      %v483 = vlaneseq
      %v484 = vshrl.u32 %v483, 7
      %486 = vset.pattern.permute.xlu0 %v484
      %487 = vperm.xlu0 %486, %v482
      %v488 = vpop.permute.xlu0 %487
      %v489 = vperm.slane %v216, 3
      %v490 = vlaneseq
      %v491 = vshrl.u32 %v490, 7
      %493 = vset.pattern.permute.xlu0 %v491
      %494 = vperm.xlu0 %493, %v489
      %v495 = vpop.permute.xlu0 %494
      %v496 = vperm.slane %v216, 4
      %v497 = vlaneseq
      %v498 = vshrl.u32 %v497, 7
      %500 = vset.pattern.permute.xlu0 %v498
      %501 = vperm.xlu0 %500, %v496
      %v502 = vpop.permute.xlu0 %501
      %v503 = vperm.slane %v216, 5
      %v504 = vlaneseq
      %v505 = vshrl.u32 %v504, 7
      %507 = vset.pattern.permute.xlu0 %v505
      %508 = vperm.xlu0 %507, %v503
      %v509 = vpop.permute.xlu0 %508
      %v510 = vperm.slane %v216, 6
      %v511 = vlaneseq
      %v512 = vshrl.u32 %v511, 7
      %514 = vset.pattern.permute.xlu0 %v512
      %515 = vperm.xlu0 %514, %v510
      %v516 = vpop.permute.xlu0 %515
      %v517 = vperm.slane %v216, 7
      %v518 = vlaneseq
      %v519 = vshrl.u32 %v518, 7
      %521 = vset.pattern.permute.xlu0 %v519
      %522 = vperm.xlu0 %521, %v517
      %v523 = vpop.permute.xlu0 %522
      %v524 = vperm.slane %v217, 0
      %v525 = vlaneseq
      %v526 = vshrl.u32 %v525, 7
      %528 = vset.pattern.permute.xlu0 %v526
      %529 = vperm.xlu0 %528, %v524
      %v530 = vpop.permute.xlu0 %529
      %v531 = vperm.slane %v217, 1
      %v532 = vlaneseq
      %v533 = vshrl.u32 %v532, 7
      %535 = vset.pattern.permute.xlu0 %v533
      %536 = vperm.xlu0 %535, %v531
      %v537 = vpop.permute.xlu0 %536
      %v538 = vperm.slane %v217, 2
      %v539 = vlaneseq
      %v540 = vshrl.u32 %v539, 7
      %542 = vset.pattern.permute.xlu0 %v540
      %543 = vperm.xlu0 %542, %v538
      %v544 = vpop.permute.xlu0 %543
      %v545 = vperm.slane %v217, 3
      %v546 = vlaneseq
      %v547 = vshrl.u32 %v546, 7
      %549 = vset.pattern.permute.xlu0 %v547
      %550 = vperm.xlu0 %549, %v545
      %v551 = vpop.permute.xlu0 %550
      %v552 = vperm.slane %v217, 4
      %v553 = vlaneseq
      %v554 = vshrl.u32 %v553, 7
      %556 = vset.pattern.permute.xlu0 %v554
      %557 = vperm.xlu0 %556, %v552
      %v558 = vpop.permute.xlu0 %557
      %v559 = vperm.slane %v217, 5
      %v560 = vlaneseq
      %v561 = vshrl.u32 %v560, 7
      %563 = vset.pattern.permute.xlu0 %v561
      %564 = vperm.xlu0 %563, %v559
      %v565 = vpop.permute.xlu0 %564
      %v566 = vperm.slane %v217, 6
      %v567 = vlaneseq
      %v568 = vshrl.u32 %v567, 7
      %570 = vset.pattern.permute.xlu0 %v568
      %571 = vperm.xlu0 %570, %v566
      %v572 = vpop.permute.xlu0 %571
      %v573 = vperm.slane %v217, 7
      %v574 = vlaneseq
      %v575 = vshrl.u32 %v574, 7
      %577 = vset.pattern.permute.xlu0 %v575
      %578 = vperm.xlu0 %577, %v573
      %v579 = vpop.permute.xlu0 %578
      %v580 = vperm.slane %v218, 0
      %v581 = vlaneseq
      %v582 = vshrl.u32 %v581, 7
      %584 = vset.pattern.permute.xlu0 %v582
      %585 = vperm.xlu0 %584, %v580
      %v586 = vpop.permute.xlu0 %585
      %v587 = vperm.slane %v218, 1
      %v588 = vlaneseq
      %v589 = vshrl.u32 %v588, 7
      %591 = vset.pattern.permute.xlu0 %v589
      %592 = vperm.xlu0 %591, %v587
      %v593 = vpop.permute.xlu0 %592
      %v594 = vperm.slane %v218, 2
      %v595 = vlaneseq
      %v596 = vshrl.u32 %v595, 7
      %598 = vset.pattern.permute.xlu0 %v596
      %599 = vperm.xlu0 %598, %v594
      %v600 = vpop.permute.xlu0 %599
      %v601 = vperm.slane %v218, 3
      %v602 = vlaneseq
      %v603 = vshrl.u32 %v602, 7
      %605 = vset.pattern.permute.xlu0 %v603
      %606 = vperm.xlu0 %605, %v601
      %v607 = vpop.permute.xlu0 %606
      %v608 = vperm.slane %v218, 4
      %v609 = vlaneseq
      %v610 = vshrl.u32 %v609, 7
      %612 = vset.pattern.permute.xlu0 %v610
      %613 = vperm.xlu0 %612, %v608
      %v614 = vpop.permute.xlu0 %613
      %v615 = vperm.slane %v218, 5
      %v616 = vlaneseq
      %v617 = vshrl.u32 %v616, 7
      %619 = vset.pattern.permute.xlu0 %v617
      %620 = vperm.xlu0 %619, %v615
      %v621 = vpop.permute.xlu0 %620
      %v622 = vperm.slane %v218, 6
      %v623 = vlaneseq
      %v624 = vshrl.u32 %v623, 7
      %626 = vset.pattern.permute.xlu0 %v624
      %627 = vperm.xlu0 %626, %v622
      %v628 = vpop.permute.xlu0 %627
      %v629 = vperm.slane %v218, 7
      %v630 = vlaneseq
      %v631 = vshrl.u32 %v630, 7
      %633 = vset.pattern.permute.xlu0 %v631
      %634 = vperm.xlu0 %633, %v629
      %v635 = vpop.permute.xlu0 %634
      %v668 = vmul.f32 %v347, %v418
      %v669 = vmul.f32 %v347, %v425
      %v670 = vmul.f32 %v347, %v432
      %v671 = vmul.f32 %v347, %v439
      %v672 = vmul.f32 %v347, %v446
      %v673 = vmul.f32 %v347, %v453
      %v674 = vmul.f32 %v347, %v460
      %v675 = vmul.f32 %v347, %v467
      %v676 = vmul.f32 %v347, %v474
      %v677 = vmul.f32 %v347, %v481
      %v678 = vmul.f32 %v347, %v488
      %v679 = vmul.f32 %v347, %v495
      %v680 = vmul.f32 %v347, %v502
      %v681 = vmul.f32 %v347, %v509
      %v682 = vmul.f32 %v347, %v516
      %v683 = vmul.f32 %v347, %v523
      %v684 = vmul.f32 %v347, %v530
      %v685 = vmul.f32 %v347, %v537
      %v686 = vmul.f32 %v347, %v544
      %v687 = vmul.f32 %v347, %v551
      %v688 = vmul.f32 %v347, %v558
      %v689 = vmul.f32 %v347, %v565
      %v690 = vmul.f32 %v347, %v572
      %v691 = vmul.f32 %v347, %v579
      %v692 = vmul.f32 %v347, %v586
      %v693 = vmul.f32 %v347, %v593
      %v694 = vmul.f32 %v347, %v600
      %v695 = vmul.f32 %v347, %v607
      %v696 = vmul.f32 %v347, %v614
      %v697 = vmul.f32 %v347, %v621
      %v698 = vmul.f32 %v347, %v628
      %v699 = vmul.f32 %v347, %v635
      %732 = vset.pattern.permute.xlu0 0
      %733 = vperm.xlu0 %732, %v668
      %v734 = vpop.permute.xlu0 %733
      %735 = vset.pattern.permute.xlu0 0
      %736 = vperm.xlu0 %735, %v669
      %v737 = vpop.permute.xlu0 %736
      %738 = vset.pattern.permute.xlu0 0
      %739 = vperm.xlu0 %738, %v670
      %v740 = vpop.permute.xlu0 %739
      %741 = vset.pattern.permute.xlu0 0
      %742 = vperm.xlu0 %741, %v671
      %v743 = vpop.permute.xlu0 %742
      %744 = vset.pattern.permute.xlu0 0
      %745 = vperm.xlu0 %744, %v672
      %v746 = vpop.permute.xlu0 %745
      %747 = vset.pattern.permute.xlu0 0
      %748 = vperm.xlu0 %747, %v673
      %v749 = vpop.permute.xlu0 %748
      %750 = vset.pattern.permute.xlu0 0
      %751 = vperm.xlu0 %750, %v674
      %v752 = vpop.permute.xlu0 %751
      %753 = vset.pattern.permute.xlu0 0
      %754 = vperm.xlu0 %753, %v675
      %v755 = vpop.permute.xlu0 %754
      %756 = vset.pattern.permute.xlu0 0
      %757 = vperm.xlu0 %756, %v676
      %v758 = vpop.permute.xlu0 %757
      %759 = vset.pattern.permute.xlu0 0
      %760 = vperm.xlu0 %759, %v677
      %v761 = vpop.permute.xlu0 %760
      %762 = vset.pattern.permute.xlu0 0
      %763 = vperm.xlu0 %762, %v678
      %v764 = vpop.permute.xlu0 %763
      %765 = vset.pattern.permute.xlu0 0
      %766 = vperm.xlu0 %765, %v679
      %v767 = vpop.permute.xlu0 %766
      %768 = vset.pattern.permute.xlu0 0
      %769 = vperm.xlu0 %768, %v680
      %v770 = vpop.permute.xlu0 %769
      %771 = vset.pattern.permute.xlu0 0
      %772 = vperm.xlu0 %771, %v681
      %v773 = vpop.permute.xlu0 %772
      %774 = vset.pattern.permute.xlu0 0
      %775 = vperm.xlu0 %774, %v682
      %v776 = vpop.permute.xlu0 %775
      %777 = vset.pattern.permute.xlu0 0
      %778 = vperm.xlu0 %777, %v683
      %v779 = vpop.permute.xlu0 %778
      %780 = vset.pattern.permute.xlu0 0
      %781 = vperm.xlu0 %780, %v684
      %v782 = vpop.permute.xlu0 %781
      %783 = vset.pattern.permute.xlu0 0
      %784 = vperm.xlu0 %783, %v685
      %v785 = vpop.permute.xlu0 %784
      %786 = vset.pattern.permute.xlu0 0
      %787 = vperm.xlu0 %786, %v686
      %v788 = vpop.permute.xlu0 %787
      %789 = vset.pattern.permute.xlu0 0
      %790 = vperm.xlu0 %789, %v687
      %v791 = vpop.permute.xlu0 %790
      %792 = vset.pattern.permute.xlu0 0
      %793 = vperm.xlu0 %792, %v688
      %v794 = vpop.permute.xlu0 %793
      %795 = vset.pattern.permute.xlu0 0
      %796 = vperm.xlu0 %795, %v689
      %v797 = vpop.permute.xlu0 %796
      %798 = vset.pattern.permute.xlu0 0
      %799 = vperm.xlu0 %798, %v690
      %v800 = vpop.permute.xlu0 %799
      %801 = vset.pattern.permute.xlu0 0
      %802 = vperm.xlu0 %801, %v691
      %v803 = vpop.permute.xlu0 %802
      %804 = vset.pattern.permute.xlu0 0
      %805 = vperm.xlu0 %804, %v692
      %v806 = vpop.permute.xlu0 %805
      %807 = vset.pattern.permute.xlu0 0
      %808 = vperm.xlu0 %807, %v693
      %v809 = vpop.permute.xlu0 %808
      %810 = vset.pattern.permute.xlu0 0
      %811 = vperm.xlu0 %810, %v694
      %v812 = vpop.permute.xlu0 %811
      %813 = vset.pattern.permute.xlu0 0
      %814 = vperm.xlu0 %813, %v695
      %v815 = vpop.permute.xlu0 %814
      %816 = vset.pattern.permute.xlu0 0
      %817 = vperm.xlu0 %816, %v696
      %v818 = vpop.permute.xlu0 %817
      %819 = vset.pattern.permute.xlu0 0
      %820 = vperm.xlu0 %819, %v697
      %v821 = vpop.permute.xlu0 %820
      %822 = vset.pattern.permute.xlu0 0
      %823 = vperm.xlu0 %822, %v698
      %v824 = vpop.permute.xlu0 %823
      %825 = vset.pattern.permute.xlu0 0
      %826 = vperm.xlu0 %825, %v699
      %v827 = vpop.permute.xlu0 %826
      %v828 = vperm.slane %v734, %v319
      %v829 = vperm.slane %v737, %v319
      %v830 = vperm.slane %v740, %v319
      %v831 = vperm.slane %v743, %v319
      %v832 = vperm.slane %v746, %v319
      %v833 = vperm.slane %v749, %v319
      %v834 = vperm.slane %v752, %v319
      %v835 = vperm.slane %v755, %v319
      %v836 = vperm.slane %v758, %v319
      %v837 = vperm.slane %v761, %v319
      %v838 = vperm.slane %v764, %v319
      %v839 = vperm.slane %v767, %v319
      %v840 = vperm.slane %v770, %v319
      %v841 = vperm.slane %v773, %v319
      %v842 = vperm.slane %v776, %v319
      %v843 = vperm.slane %v779, %v319
      %v844 = vperm.slane %v782, %v319
      %v845 = vperm.slane %v785, %v319
      %v846 = vperm.slane %v788, %v319
      %v847 = vperm.slane %v791, %v319
      %v848 = vperm.slane %v794, %v319
      %v849 = vperm.slane %v797, %v319
      %v850 = vperm.slane %v800, %v319
      %v851 = vperm.slane %v803, %v319
      %v852 = vperm.slane %v806, %v319
      %v853 = vperm.slane %v809, %v319
      %v854 = vperm.slane %v812, %v319
      %v855 = vperm.slane %v815, %v319
      %v856 = vperm.slane %v818, %v319
      %v857 = vperm.slane %v821, %v319
      %v858 = vperm.slane %v824, %v319
      %v859 = vperm.slane %v827, %v319
      %v860 = vsel %vm340, %v829, %v828
      %vm861 = vcmask 1042434
      %v862 = vsel %vm861, %v830, %v860
      %vm863 = vcmask 1043459
      %v864 = vsel %vm863, %v831, %v862
      %vm865 = vcmask 1044484
      %v866 = vsel %vm865, %v832, %v864
      %vm867 = vcmask 1045509
      %v868 = vsel %vm867, %v833, %v866
      %vm869 = vcmask 1046534
      %v870 = vsel %vm869, %v834, %v868
      %vm871 = vcmask 1047559
      %v872 = vsel %vm871, %v835, %v870
      %v873 = vsel %vm340, %v837, %v836
      %v874 = vsel %vm861, %v838, %v873
      %v875 = vsel %vm863, %v839, %v874
      %v876 = vsel %vm865, %v840, %v875
      %v877 = vsel %vm867, %v841, %v876
      %v878 = vsel %vm869, %v842, %v877
      %v879 = vsel %vm871, %v843, %v878
      %v880 = vsel %vm340, %v845, %v844
      %v881 = vsel %vm861, %v846, %v880
      %v882 = vsel %vm863, %v847, %v881
      %v883 = vsel %vm865, %v848, %v882
      %v884 = vsel %vm867, %v849, %v883
      %v885 = vsel %vm869, %v850, %v884
      %v886 = vsel %vm871, %v851, %v885
      %v887 = vsel %vm340, %v853, %v852
      %v888 = vsel %vm861, %v854, %v887
      %v889 = vsel %vm863, %v855, %v888
      %v890 = vsel %vm865, %v856, %v889
      %v891 = vsel %vm867, %v857, %v890
      %v892 = vsel %vm869, %v858, %v891
      %v893 = vsel %vm871, %v859, %v892
      %vm898 = vcmask 15360
      %v899 = vsel %vm898, %v872, 0.0
      %900 = vadd.xlane.f32.xlu0 %v899
      %v901 = vpop.xlane.xlu0 %900
      %v902 = vsel %vm898, %v879, 0.0
      %903 = vadd.xlane.f32.xlu0 %v902
      %v904 = vpop.xlane.xlu0 %903
      %v905 = vsel %vm898, %v886, 0.0
      %906 = vadd.xlane.f32.xlu0 %v905
      %v907 = vpop.xlane.xlu0 %906
      %v908 = vsel %vm898, %v893, 0.0
      %909 = vadd.xlane.f32.xlu0 %v908
      %v910 = vpop.xlane.xlu0 %909
      %v911 = vmul.f32 %v407, %v418
      %v912 = vmul.f32 %v407, %v425
      %v913 = vmul.f32 %v407, %v432
      %v914 = vmul.f32 %v407, %v439
      %v915 = vmul.f32 %v407, %v446
      %v916 = vmul.f32 %v407, %v453
      %v917 = vmul.f32 %v407, %v460
      %v918 = vmul.f32 %v407, %v467
      %v919 = vmul.f32 %v407, %v474
      %v920 = vmul.f32 %v407, %v481
      %v921 = vmul.f32 %v407, %v488
      %v922 = vmul.f32 %v407, %v495
      %v923 = vmul.f32 %v407, %v502
      %v924 = vmul.f32 %v407, %v509
      %v925 = vmul.f32 %v407, %v516
      %v926 = vmul.f32 %v407, %v523
      %v927 = vmul.f32 %v407, %v530
      %v928 = vmul.f32 %v407, %v537
      %v929 = vmul.f32 %v407, %v544
      %v930 = vmul.f32 %v407, %v551
      %v931 = vmul.f32 %v407, %v558
      %v932 = vmul.f32 %v407, %v565
      %v933 = vmul.f32 %v407, %v572
      %v934 = vmul.f32 %v407, %v579
      %v935 = vmul.f32 %v407, %v586
      %v936 = vmul.f32 %v407, %v593
      %v937 = vmul.f32 %v407, %v600
      %v938 = vmul.f32 %v407, %v607
      %v939 = vmul.f32 %v407, %v614
      %v940 = vmul.f32 %v407, %v621
      %v941 = vmul.f32 %v407, %v628
      %v942 = vmul.f32 %v407, %v635
      %975 = vset.pattern.permute.xlu0 0
      %976 = vperm.xlu0 %975, %v911
      %v977 = vpop.permute.xlu0 %976
      %978 = vset.pattern.permute.xlu0 0
      %979 = vperm.xlu0 %978, %v912
      %v980 = vpop.permute.xlu0 %979
      %981 = vset.pattern.permute.xlu0 0
      %982 = vperm.xlu0 %981, %v913
      %v983 = vpop.permute.xlu0 %982
      %984 = vset.pattern.permute.xlu0 0
      %985 = vperm.xlu0 %984, %v914
      %v986 = vpop.permute.xlu0 %985
      %987 = vset.pattern.permute.xlu0 0
      %988 = vperm.xlu0 %987, %v915
      %v989 = vpop.permute.xlu0 %988
      %990 = vset.pattern.permute.xlu0 0
      %991 = vperm.xlu0 %990, %v916
      %v992 = vpop.permute.xlu0 %991
      %993 = vset.pattern.permute.xlu0 0
      %994 = vperm.xlu0 %993, %v917
      %v995 = vpop.permute.xlu0 %994
      %996 = vset.pattern.permute.xlu0 0
      %997 = vperm.xlu0 %996, %v918
      %v998 = vpop.permute.xlu0 %997
      %999 = vset.pattern.permute.xlu0 0
      %1000 = vperm.xlu0 %999, %v919
      %v1001 = vpop.permute.xlu0 %1000
      %1002 = vset.pattern.permute.xlu0 0
      %1003 = vperm.xlu0 %1002, %v920
      %v1004 = vpop.permute.xlu0 %1003
      %1005 = vset.pattern.permute.xlu0 0
      %1006 = vperm.xlu0 %1005, %v921
      %v1007 = vpop.permute.xlu0 %1006
      %1008 = vset.pattern.permute.xlu0 0
      %1009 = vperm.xlu0 %1008, %v922
      %v1010 = vpop.permute.xlu0 %1009
      %1011 = vset.pattern.permute.xlu0 0
      %1012 = vperm.xlu0 %1011, %v923
      %v1013 = vpop.permute.xlu0 %1012
      %1014 = vset.pattern.permute.xlu0 0
      %1015 = vperm.xlu0 %1014, %v924
      %v1016 = vpop.permute.xlu0 %1015
      %1017 = vset.pattern.permute.xlu0 0
      %1018 = vperm.xlu0 %1017, %v925
      %v1019 = vpop.permute.xlu0 %1018
      %1020 = vset.pattern.permute.xlu0 0
      %1021 = vperm.xlu0 %1020, %v926
      %v1022 = vpop.permute.xlu0 %1021
      %1023 = vset.pattern.permute.xlu0 0
      %1024 = vperm.xlu0 %1023, %v927
      %v1025 = vpop.permute.xlu0 %1024
      %1026 = vset.pattern.permute.xlu0 0
      %1027 = vperm.xlu0 %1026, %v928
      %v1028 = vpop.permute.xlu0 %1027
      %1029 = vset.pattern.permute.xlu0 0
      %1030 = vperm.xlu0 %1029, %v929
      %v1031 = vpop.permute.xlu0 %1030
      %1032 = vset.pattern.permute.xlu0 0
      %1033 = vperm.xlu0 %1032, %v930
      %v1034 = vpop.permute.xlu0 %1033
      %1035 = vset.pattern.permute.xlu0 0
      %1036 = vperm.xlu0 %1035, %v931
      %v1037 = vpop.permute.xlu0 %1036
      %1038 = vset.pattern.permute.xlu0 0
      %1039 = vperm.xlu0 %1038, %v932
      %v1040 = vpop.permute.xlu0 %1039
      %1041 = vset.pattern.permute.xlu0 0
      %1042 = vperm.xlu0 %1041, %v933
      %v1043 = vpop.permute.xlu0 %1042
      %1044 = vset.pattern.permute.xlu0 0
      %1045 = vperm.xlu0 %1044, %v934
      %v1046 = vpop.permute.xlu0 %1045
      %1047 = vset.pattern.permute.xlu0 0
      %1048 = vperm.xlu0 %1047, %v935
      %v1049 = vpop.permute.xlu0 %1048
      %1050 = vset.pattern.permute.xlu0 0
      %1051 = vperm.xlu0 %1050, %v936
      %v1052 = vpop.permute.xlu0 %1051
      %1053 = vset.pattern.permute.xlu0 0
      %1054 = vperm.xlu0 %1053, %v937
      %v1055 = vpop.permute.xlu0 %1054
      %1056 = vset.pattern.permute.xlu0 0
      %1057 = vperm.xlu0 %1056, %v938
      %v1058 = vpop.permute.xlu0 %1057
      %1059 = vset.pattern.permute.xlu0 0
      %1060 = vperm.xlu0 %1059, %v939
      %v1061 = vpop.permute.xlu0 %1060
      %1062 = vset.pattern.permute.xlu0 0
      %1063 = vperm.xlu0 %1062, %v940
      %v1064 = vpop.permute.xlu0 %1063
      %1065 = vset.pattern.permute.xlu0 0
      %1066 = vperm.xlu0 %1065, %v941
      %v1067 = vpop.permute.xlu0 %1066
      %1068 = vset.pattern.permute.xlu0 0
      %1069 = vperm.xlu0 %1068, %v942
      %v1070 = vpop.permute.xlu0 %1069
      %v1071 = vperm.slane %v977, %v319
      %v1072 = vperm.slane %v980, %v319
      %v1073 = vperm.slane %v983, %v319
      %v1074 = vperm.slane %v986, %v319
      %v1075 = vperm.slane %v989, %v319
      %v1076 = vperm.slane %v992, %v319
      %v1077 = vperm.slane %v995, %v319
      %v1078 = vperm.slane %v998, %v319
      %v1079 = vperm.slane %v1001, %v319
      %v1080 = vperm.slane %v1004, %v319
      %v1081 = vperm.slane %v1007, %v319
      %v1082 = vperm.slane %v1010, %v319
      %v1083 = vperm.slane %v1013, %v319
      %v1084 = vperm.slane %v1016, %v319
      %v1085 = vperm.slane %v1019, %v319
      %v1086 = vperm.slane %v1022, %v319
      %v1087 = vperm.slane %v1025, %v319
      %v1088 = vperm.slane %v1028, %v319
      %v1089 = vperm.slane %v1031, %v319
      %v1090 = vperm.slane %v1034, %v319
      %v1091 = vperm.slane %v1037, %v319
      %v1092 = vperm.slane %v1040, %v319
      %v1093 = vperm.slane %v1043, %v319
      %v1094 = vperm.slane %v1046, %v319
      %v1095 = vperm.slane %v1049, %v319
      %v1096 = vperm.slane %v1052, %v319
      %v1097 = vperm.slane %v1055, %v319
      %v1098 = vperm.slane %v1058, %v319
      %v1099 = vperm.slane %v1061, %v319
      %v1100 = vperm.slane %v1064, %v319
      %v1101 = vperm.slane %v1067, %v319
      %v1102 = vperm.slane %v1070, %v319
      %v1103 = vsel %vm340, %v1072, %v1071
      %v1104 = vsel %vm861, %v1073, %v1103
      %v1105 = vsel %vm863, %v1074, %v1104
      %v1106 = vsel %vm865, %v1075, %v1105
      %v1107 = vsel %vm867, %v1076, %v1106
      %v1108 = vsel %vm869, %v1077, %v1107
      %v1109 = vsel %vm871, %v1078, %v1108
      %v1110 = vsel %vm340, %v1080, %v1079
      %v1111 = vsel %vm861, %v1081, %v1110
      %v1112 = vsel %vm863, %v1082, %v1111
      %v1113 = vsel %vm865, %v1083, %v1112
      %v1114 = vsel %vm867, %v1084, %v1113
      %v1115 = vsel %vm869, %v1085, %v1114
      %v1116 = vsel %vm871, %v1086, %v1115
      %v1117 = vsel %vm340, %v1088, %v1087
      %v1118 = vsel %vm861, %v1089, %v1117
      %v1119 = vsel %vm863, %v1090, %v1118
      %v1120 = vsel %vm865, %v1091, %v1119
      %v1121 = vsel %vm867, %v1092, %v1120
      %v1122 = vsel %vm869, %v1093, %v1121
      %v1123 = vsel %vm871, %v1094, %v1122
      %v1124 = vsel %vm340, %v1096, %v1095
      %v1125 = vsel %vm861, %v1097, %v1124
      %v1126 = vsel %vm863, %v1098, %v1125
      %v1127 = vsel %vm865, %v1099, %v1126
      %v1128 = vsel %vm867, %v1100, %v1127
      %v1129 = vsel %vm869, %v1101, %v1128
      %v1130 = vsel %vm871, %v1102, %v1129
      %v1135 = vsel %vm898, %v1109, 0.0
      %1136 = vadd.xlane.f32.xlu0 %v1135
      %v1137 = vpop.xlane.xlu0 %1136
      %v1138 = vsel %vm898, %v1116, 0.0
      %1139 = vadd.xlane.f32.xlu0 %v1138
      %v1140 = vpop.xlane.xlu0 %1139
      %v1141 = vsel %vm898, %v1123, 0.0
      %1142 = vadd.xlane.f32.xlu0 %v1141
      %v1143 = vpop.xlane.xlu0 %1142
      %v1144 = vsel %vm898, %v1130, 0.0
      %1145 = vadd.xlane.f32.xlu0 %v1144
      %v1146 = vpop.xlane.xlu0 %1145
      %v1147 = vadd.f32 %v901, %v1137
      %v1148 = vadd.f32 %v904, %v1140
      %v1149 = vadd.f32 %v907, %v1143
      %v1150 = vadd.f32 %v910, %v1146
      %v1151 = vxor.u32 %v1147, 2147483648
      %v1152 = vxor.u32 %v1148, 2147483648
      %v1153 = vxor.u32 %v1149, 2147483648
      %v1154 = vxor.u32 %v1150, 2147483648
      %v1155 = vmul.f32 %v1151, 1.442695
      %v1156 = vpow.pop %v1155
      %v1157 = vmul.f32 %v1152, 1.442695
      %v1158 = vpow.pop %v1157
      %v1159 = vmul.f32 %v1153, 1.442695
      %v1160 = vpow.pop %v1159
      %v1161 = vmul.f32 %v1154, 1.442695
      %v1162 = vpow.pop %v1161
      %v1163 = vadd.f32 %v1156, 1.0
      %v1164 = vadd.f32 %v1158, 1.0
      %v1165 = vadd.f32 %v1160, 1.0
      %v1166 = vadd.f32 %v1162, 1.0
      %v1167 = vrcp.pop %v1163
      %v1168 = vmul.f32 %v1163, %v1167
      %v1169 = vsub.f32 1.0, %v1168
      %v1170 = vmul.f32 %v1167, %v1169
      %v1171 = vadd.f32 %v1167, %v1170
      %vm1172 = vweird.f32 %v1163
      %vm1173 = vweird.f32 %v1167
      %vm1174 = vmor %vm1172, %vm1173
      %v1175 = vsel %vm1174, %v1167, %v1171
      %v1176 = vand.u32 2147483647, %v1163
      %vm1177 = vcmp.eq.f32.partialorder %v1176, 8.507059e+37
      %v1178 = vand.u32 %v1163, 2147483648
      %v1179 = vor.u32 1.1754944e-38, %v1178
      %v1180 = vsel %vm1177, %v1179, %v1175
      %v1181 = vmul.f32 1.0, %v1180
      %v1182 = vrcp.pop %v1164
      %v1183 = vmul.f32 %v1164, %v1182
      %v1184 = vsub.f32 1.0, %v1183
      %v1185 = vmul.f32 %v1182, %v1184
      %v1186 = vadd.f32 %v1182, %v1185
      %vm1187 = vweird.f32 %v1164
      %vm1188 = vweird.f32 %v1182
      %vm1189 = vmor %vm1187, %vm1188
      %v1190 = vsel %vm1189, %v1182, %v1186
      %v1191 = vand.u32 2147483647, %v1164
      %vm1192 = vcmp.eq.f32.partialorder %v1191, 8.507059e+37
      %v1193 = vand.u32 %v1164, 2147483648
      %v1194 = vor.u32 1.1754944e-38, %v1193
      %v1195 = vsel %vm1192, %v1194, %v1190
      %v1196 = vmul.f32 1.0, %v1195
      %v1197 = vrcp.pop %v1165
      %v1198 = vmul.f32 %v1165, %v1197
      %v1199 = vsub.f32 1.0, %v1198
      %v1200 = vmul.f32 %v1197, %v1199
      %v1201 = vadd.f32 %v1197, %v1200
      %vm1202 = vweird.f32 %v1165
      %vm1203 = vweird.f32 %v1197
      %vm1204 = vmor %vm1202, %vm1203
      %v1205 = vsel %vm1204, %v1197, %v1201
      %v1206 = vand.u32 2147483647, %v1165
      %vm1207 = vcmp.eq.f32.partialorder %v1206, 8.507059e+37
      %v1208 = vand.u32 %v1165, 2147483648
      %v1209 = vor.u32 1.1754944e-38, %v1208
      %v1210 = vsel %vm1207, %v1209, %v1205
      %v1211 = vmul.f32 1.0, %v1210
      %v1212 = vrcp.pop %v1166
      %v1213 = vmul.f32 %v1166, %v1212
      %v1214 = vsub.f32 1.0, %v1213
      %v1215 = vmul.f32 %v1212, %v1214
      %v1216 = vadd.f32 %v1212, %v1215
      %vm1217 = vweird.f32 %v1166
      %vm1218 = vweird.f32 %v1212
      %vm1219 = vmor %vm1217, %vm1218
      %v1220 = vsel %vm1219, %v1212, %v1216
      %v1221 = vand.u32 2147483647, %v1166
      %vm1222 = vcmp.eq.f32.partialorder %v1221, 8.507059e+37
      %v1223 = vand.u32 %v1166, 2147483648
      %v1224 = vor.u32 1.1754944e-38, %v1223
      %v1225 = vsel %vm1222, %v1224, %v1220
      %v1226 = vmul.f32 1.0, %v1225
      %v1227 = vmul.f32 %v171, %v1181
      %v1228 = vmul.f32 %v172, %v1181
      %v1229 = vmul.f32 %v173, %v1196
      %v1230 = vmul.f32 %v174, %v1196
      %v1231 = vmul.f32 %v175, %v1211
      %v1232 = vmul.f32 %v176, %v1211
      %v1233 = vmul.f32 %v177, %v1226
      %v1234 = vmul.f32 %v178, %v1226
      %1235 = vst [vmem:[%s170] sm:$0xff] %v1227
      %1236 = vst [vmem:[%s170 + $0x8] sm:$0xff] %v1228
      %1237 = vst [vmem:[%s170 + $0x10] sm:$0xff] %v1229
      %1238 = vst [vmem:[%s170 + $0x18] sm:$0xff] %v1230
      %1239 = vst [vmem:[%s170 + $0x20] sm:$0xff] %v1231
      %1240 = vst [vmem:[%s170 + $0x28] sm:$0xff] %v1232
      %1241 = vst [vmem:[%s170 + $0x30] sm:$0xff] %v1233
      %1242 = vst [vmem:[%s170 + $0x38] sm:$0xff] %v1234
      %p1243 = scmp.lt.s32.totalorder %s14, 1
      %s1244 = scalar_select %p1243, %s14, 1
      %s1245 = smul.addr %s1244, 8
      %s1246 = smul.addr %s1245, 8
      %s1247 = scalar_lea.vmem %s3, %s1246
      // Predicated region
      $region33: #{channel_attention_pallas.1} parent=31 // pred_check
        %p1248 = pneg %p100
      $region34: #{channel_attention_pallas.1} parent=31 // pred_check_branch
        %1250 = sbr.rel (%p1248) target = $region36
      $region35: #{channel_attention_pallas.1} parent=31 // pred_region
        _
      $region36: #{channel_attention_pallas.1} parent=31 // pred_fallthru
        _
    $region32: #{channel_attention_pallas.1} parent=5 // pred_fallthru
      _
    %p1251 = scmp.le.s32.totalorder 2, %s9
    // Predicated region
    $region37: #{channel_attention_pallas.1} parent=5 // pred_check
      %p1252 = pneg %p1251
    $region38: #{channel_attention_pallas.1} parent=5 // pred_check_branch
      %1254 = sbr.rel (%p1252) target = $region40
    $region39: #{channel_attention_pallas.1} parent=5 // pred_region
      %s1255 = ssub.s32 %s9, 2
      // Predicated region
      $region41: #{channel_attention_pallas.1} parent=39 // pred_check
        %p1256 = pneg %p106
      $region42: #{channel_attention_pallas.1} parent=39 // pred_check_branch
        %1258 = sbr.rel (%p1256) target = $region44
      $region43: #{channel_attention_pallas.1} parent=39 // pred_region
        %p1259 = scmp.lt.s32.totalorder %s15, 1
        %s1260 = scalar_select %p1259, %s15, 1
        %s1261 = smul.addr %s1260, 8
        %s1262 = smul.addr %s1261, 8
        %s1263 = scalar_lea.vmem %s3, %s1262
      $region44: #{channel_attention_pallas.1} parent=39 // pred_fallthru
        _
    $region40: #{channel_attention_pallas.1} parent=5 // pred_fallthru
      _
  $region6: #{channel_attention_pallas.1} parent=0 // loop_footer
    %s13 = sadd.s32 1, %s9
  $region7: #{channel_attention_pallas.1} parent=0 // loop_footer_branch
    %8 = sbr.rel target = $region3
  $region8: #{channel_attention_pallas.1} parent=0 // loop_exit
    _

</llo_original>
